<compile_context>
chip_gen: v6e
topology: v6e:2x2x1
jax: 0.10.0
libtpu: 0.0.40
codegen_flags: <defaults>
</compile_context>

<pallas_src>
import jax
import jax.numpy as jnp
from jax.experimental import pallas as pl
from jax.experimental.pallas import tpu as pltpu

_LANE = 128            # f32 vreg lane width
_SUBLANE_PACK = 16     # row-tile granularity valid for both f32 (8) and bf16 (16)
_MAX_ROW_TILE = 4096   # 4096 x 128 x 4 B = 2 MiB per f32 buffer


def _round_up(v, m):
    return ((v + m - 1) // m) * m


def logistic_kernel(x_ref, w_ref, b_ref, o_ref):
    # Linear(1, 1): y = x * w + b (matmul degenerates to scale + shift),
    # then sigmoid. w/b are SMEM scalars. Math in f32 in-register; store in
    # the I/O dtype (supports bf16 streaming without bf16 VALU on v5e).
    w = w_ref[0]
    b = b_ref[0]
    x = x_ref[...].astype(jnp.float32)
    o_ref[...] = jax.nn.sigmoid(x * w + b).astype(o_ref.dtype)


def logistic_forward(x, w, b):
    """x: (N, 1); w: (1, 1) (torch Linear weight layout); b: (1,)."""
    n = x.shape[0]
    orig_dtype = x.dtype
    # Keep HBM traffic in the input dtype when it is f32/bf16.
    io_dtype = orig_dtype if orig_dtype in (jnp.bfloat16, jnp.float32) else jnp.float32

    # ---- lane-dense repack: (N, 1) -> (rows, 128) slab -------------------
    flat = x.reshape(-1).astype(io_dtype)
    rows = pl.cdiv(n, _LANE)
    n_padded = rows * _LANE
    pad_needed = n_padded != n
    if pad_needed:
        flat = jnp.pad(flat, (0, n_padded - n))
    slab = flat.reshape(rows, _LANE)

    # Row tile: multiple of 16 sublanes (valid f32/bf16 packing), capped at
    # _MAX_ROW_TILE, and capped at ~rows/2 so the grid has >=2 steps when
    # there is enough work (keeps both v7x TensorCores busy). The final grid
    # block may be partial; Pallas masks it.
    row_tile = min(_MAX_ROW_TILE, _round_up(pl.cdiv(rows, 2), _SUBLANE_PACK))
    row_tile = max(row_tile, _SUBLANE_PACK)
    grid = (pl.cdiv(rows, row_tile),)

    w_s = w.reshape(1).astype(jnp.float32)   # SMEM scalar
    b_s = b.reshape(1).astype(jnp.float32)   # SMEM scalar

    out_slab = pl.pallas_call(
        logistic_kernel,
        out_shape=jax.ShapeDtypeStruct((rows, _LANE), io_dtype),
        grid=grid,
        in_specs=[
            pl.BlockSpec((row_tile, _LANE), lambda i: (i, 0)),
            pl.BlockSpec(memory_space=pltpu.MemorySpace.SMEM),
            pl.BlockSpec(memory_space=pltpu.MemorySpace.SMEM),
        ],
        out_specs=pl.BlockSpec((row_tile, _LANE), lambda i: (i, 0)),
        compiler_params=pltpu.CompilerParams(
            dimension_semantics=("parallel",)),
    )(slab, w_s, b_s)

    # ---- unpack back to (N, 1) --------------------------------------------
    if pad_needed:
        out = out_slab.reshape(-1)[:n].reshape(n, 1)
    else:
        out = out_slab.reshape(n, 1)  # pure metadata reshape, no extra HBM pass
    return out.astype(orig_dtype)


if __name__ == "__main__":
    key = jax.random.PRNGKey(0)
    kx, kw, kb, kx2 = jax.random.split(key, 4)

    # Deterministic parameter init mimicking torch.nn.Linear(1, 1):
    # uniform(-1/sqrt(in_features), +1/sqrt(in_features)) with in_features=1.
    w = jax.random.uniform(kw, (1, 1), dtype=jnp.float32, minval=-1.0, maxval=1.0)
    b = jax.random.uniform(kb, (1,), dtype=jnp.float32, minval=-1.0, maxval=1.0)

    # Small example (matches the module's batch-of-scalars usage).
    N = 8
    x = jax.random.normal(kx, (N, 1), dtype=jnp.float32)
    y = logistic_forward(x, w, b)
    jax.block_until_ready(y)
    y_ref = jax.nn.sigmoid(x @ w.T + b)
    assert y.shape == (N, 1)
    assert jnp.allclose(y, y_ref, atol=1e-6), "mismatch vs reference (N=8)"

    # Secondary check exercising padding + a multi-step grid with a partial
    # final block (rows = 547, row_tile = 288 -> grid = (2,)).
    N2 = 70000
    x2 = jax.random.normal(kx2, (N2, 1), dtype=jnp.float32)
    y2 = logistic_forward(x2, w, b)
    jax.block_until_ready(y2)
    y2_ref = jax.nn.sigmoid(x2 @ w.T + b)
    assert y2.shape == (N2, 1)
    assert jnp.allclose(y2, y2_ref, atol=1e-6), "mismatch vs reference (N=70000)"

    # Exact multiple of 128: no pad, no output-slice HBM pass.
    N3 = 128 * 1024
    x3 = jax.random.normal(kx, (N3, 1), dtype=jnp.float32)
    y3 = logistic_forward(x3, w, b)
    jax.block_until_ready(y3)
    y3_ref = jax.nn.sigmoid(x3 @ w.T + b)
    assert y3.shape == (N3, 1)
    assert jnp.allclose(y3, y3_ref, atol=1e-6), "mismatch vs reference (N=131072)"

    print("KERNEL_OK")
</pallas_src>

<mosaic_0001>
module attributes {stable_mosaic.version = 11 : i64} {
  func.func @logistic_kernel(%arg0: i32, %arg1: memref<16x128xf32, #tpu.memory_space<vmem>>, %arg2: memref<1xf32, #tpu.memory_space<smem>>, %arg3: memref<1xf32, #tpu.memory_space<smem>>, %arg4: memref<16x128xf32, #tpu.memory_space<vmem>>) attributes {dimension_semantics = [#tpu.dimension_semantics<parallel>], iteration_bounds = array<i64: 1>, scalar_prefetch = 0 : i64, scratch_operands = 0 : i64, tpu.core_type = #tpu.core_type<tc>, window_params = [{transform_indices = @transform_0, window_bounds = array<i64: 16, 128>}, {transform_indices = @transform_1, window_bounds = array<i64: 1>}, {transform_indices = @transform_2, window_bounds = array<i64: 1>}, {transform_indices = @transform_3, window_bounds = array<i64: 16, 128>}]} {
    %c0 = arith.constant 0 : index
    %0 = memref.load %arg2[%c0] : memref<1xf32, #tpu.memory_space<smem>>
    %c0_0 = arith.constant 0 : index
    %1 = memref.load %arg3[%c0_0] : memref<1xf32, #tpu.memory_space<smem>>
    %c0_1 = arith.constant 0 : index
    %c0_2 = arith.constant 0 : index
    %2 = vector.load %arg1[%c0_1, %c0_2] : memref<16x128xf32, #tpu.memory_space<vmem>>, vector<16x128xf32>
    %3 = vector.broadcast %0 : f32 to vector<16x128xf32>
    %4 = arith.mulf %2, %3 : vector<16x128xf32>
    %5 = vector.broadcast %1 : f32 to vector<16x128xf32>
    %6 = arith.addf %4, %5 : vector<16x128xf32>
    %7 = arith.negf %6 : vector<16x128xf32>
    %8 = math.exp %7 : vector<16x128xf32>
    %cst = arith.constant 1.000000e+00 : f32
    %9 = vector.broadcast %cst : f32 to vector<16x128xf32>
    %10 = arith.addf %9, %8 : vector<16x128xf32>
    %11 = arith.divf %9, %10 : vector<16x128xf32>
    %c0_3 = arith.constant 0 : index
    %c0_4 = arith.constant 0 : index
    %12 = vector.load %arg4[%c0_3, %c0_4] : memref<16x128xf32, #tpu.memory_space<vmem>>, vector<16x128xf32>
    tpu.vector_store %arg4[%c0_3, %c0_4], %11 {strides = array<i32>} : memref<16x128xf32, #tpu.memory_space<vmem>>, vector<16x128xf32>,
    return
  }
  func.func @transform_0(%arg0: i32) -> (i32, i32) {
    %c0_i32 = arith.constant 0 : i32
    %c0_i32_0 = arith.constant 0 : i32
    return %arg0, %c0_i32 : i32, i32
  }
  func.func @transform_1(%arg0: i32) -> i32 {
    %c0_i32 = arith.constant 0 : i32
    %c0_i32_0 = arith.constant 0 : i32
    return %c0_i32 : i32
  }
  func.func @transform_2(%arg0: i32) -> i32 {
    %c0_i32 = arith.constant 0 : i32
    %c0_i32_0 = arith.constant 0 : i32
    return %c0_i32 : i32
  }
  func.func @transform_3(%arg0: i32) -> (i32, i32) {
    %c0_i32 = arith.constant 0 : i32
    %c0_i32_0 = arith.constant 0 : i32
    return %arg0, %c0_i32 : i32, i32
  }
}

</mosaic_0001>

<llo_original>
// kernel: tpu_custom_call.1
$region0: #{tpu_custom_call.1}
  #allocation0 [shape = 'u32[]', space=smem, size = 0x4, offset = 0x4, fixed_abs, tag = 'smem constant byte address 0x4 - core index']
  #allocation1 [shape = 'u32[144,128]{1,0:T(1,128)}', space=vmem, size = 0x12000, scoped, tag = 'internal scratch']
  #allocation2 [shape = 'f32[1]{0:T(128)S(6)}', space=smem, size = 0x200, scoped, tag = 'scoped memory for tpu_custom_call.1']
  #allocation3 [shape = 'f32[1]{0:T(128)S(6)}', space=smem, size = 0x200, scoped, tag = 'scoped memory for tpu_custom_call.1']
  %s0 = inlined_call_operand.vmem [shape: f32[1,128], index: 0, kind: input, shape index: {}]
  %s1 = inlined_call_operand.<no memory space> [shape: f32[1], index: 1, kind: input, shape index: {}]
  %s2 = inlined_call_operand.<no memory space> [shape: f32[1], index: 2, kind: input, shape index: {}]
  %s3 = inlined_call_operand.hbm [shape: f32[1,128], index: 3, kind: output, shape index: {}]
  %s4 = sld [smem:[#allocation0]]
  $region22: #{tpu_custom_call.1} parent=0
    _
  %s6 = ssub.s32 1, %s4
  %s7 = scalar_select 0, %s6, %s4
  %8 = sst [smem:[#allocation2]] %s1
  %9 = sst [smem:[#allocation3]] %s2
  $region1: #{tpu_custom_call.1} parent=0
    #allocation4 [shape = 'u8[8192]{0}', space=vmem, size = 0x2000, scoped, tag = 'output window, operand 0, single buffered']
    #allocation5 [shape = 's32[1]{0}', space=sflag, size = 0x4, scoped, tag = 'scoped memory for tpu_custom_call.1']
    %10 = vsyncpa [#allocation5], 0
    // Predicated region
    $region2: #{tpu_custom_call.1} parent=1 // pred_check
      _
    $region3: #{tpu_custom_call.1} parent=1 // pred_check_branch
      %12 = sbr.rel (0) target = $region5
    $region4: #{tpu_custom_call.1} parent=1 // pred_region
      _
    $region5: #{tpu_custom_call.1} parent=1 // pred_fallthru
      _
    // Predicated region
    $region6: #{tpu_custom_call.1} parent=1 // pred_check
      _
    $region7: #{tpu_custom_call.1} parent=1 // pred_check_branch
      %14 = sbr.rel (0) target = $region9
    $region8: #{tpu_custom_call.1} parent=1 // pred_region
      _
    $region9: #{tpu_custom_call.1} parent=1 // pred_fallthru
      _
    // Predicated region
    $region10: #{tpu_custom_call.1} parent=1 // pred_check
      _
    $region11: #{tpu_custom_call.1} parent=1 // pred_check_branch
      %16 = sbr.rel (0) target = $region13
    $region12: #{tpu_custom_call.1} parent=1 // pred_region
      _
    $region13: #{tpu_custom_call.1} parent=1 // pred_fallthru
      _
    %s17 = sld [smem:[#allocation2]]
    %s18 = sld [smem:[#allocation3]]
    %v19 = vld [vmem:[%s0] sm:$0xff]
    %v20 = vld [vmem:[%s0 + $0x8] sm:$0xff]
    %v21 = vstv %s17
    %v22 = vmul.f32 %v19, %v21
    %v23 = vmul.f32 %v20, %v21
    %v24 = vstv %s18
    %v25 = vadd.f32 %v22, %v24
    %v26 = vadd.f32 %v23, %v24
    %v27 = vxor.u32 %v25, 2147483648
    %v28 = vxor.u32 %v26, 2147483648
    %v29 = vmul.f32 %v27, 1.442695
    %v30 = vpow.pop %v29
    %v31 = vmul.f32 %v28, 1.442695
    %v32 = vpow.pop %v31
    %v33 = vadd.f32 %v30, 1.0
    %v34 = vadd.f32 %v32, 1.0
    %v35 = vrcp.pop %v33
    %v36 = vmul.f32 1.0, %v35
    %v37 = vrcp.pop %v34
    %v38 = vmul.f32 1.0, %v37
    %39 = vst [vmem:[#allocation4] sm:$0xff] %v36
    %40 = vst [vmem:[#allocation4 + $0x8] sm:$0xff] %v38
    // Predicated region
    $region14: #{tpu_custom_call.1} parent=1 // pred_check
      _
    $region15: #{tpu_custom_call.1} parent=1 // pred_check_branch
      %42 = sbr.rel (0) target = $region17
    $region16: #{tpu_custom_call.1} parent=1 // pred_region
      %s44 = ssub.s32 256, 16
      %45 = vsyncadd [#allocation5], %s44
      %s46 = sshll.u32 [#allocation4], 4
      %s47 = int_to_ptr.vmem [resolvable:$true] %s46
      %52 = dma.vmem_to_hbm [thread:$0]  %s47, 16, %s3, [#allocation5], 16, 16, 1
    $region17: #{tpu_custom_call.1} parent=1 // pred_fallthru
      _
    // Predicated region
    $region18: #{tpu_custom_call.1} parent=1 // pred_check
      _
    $region19: #{tpu_custom_call.1} parent=1 // pred_check_branch
      %54 = sbr.rel (0) target = $region21
    $region20: #{tpu_custom_call.1} parent=1 // pred_region
      %55 = dma.done [#allocation5], 256
    $region21: #{tpu_custom_call.1} parent=1 // pred_fallthru
      _
    %56 = vsyncpa [#allocation5], 1

</llo_original>
